<compile_context>
chip_gen: v7x
topology: tpu7x:2x2x1
jax: 0.10.0
libtpu: 0.0.40
codegen_flags: <defaults>
</compile_context>

<pallas_src>
import jax
import jax.numpy as jnp
from jax.experimental import pallas as pl
from jax.experimental.pallas import tpu as pltpu

LANE = 128
BATCH_ALIGN = 16      # bf16 sublane packing (also satisfies the f32 multiple-of-8 rule)


def _round_up(n, m):
    return ((n + m - 1) // m) * m


def _cdiv(a, b):
    return (a + b - 1) // b


def _pad2d(a, rows, cols):
    return jnp.pad(a, ((0, rows - a.shape[0]), (0, cols - a.shape[1])))


def qnetwork_kernel(x_ref, w1_ref, b1_ref, w2_ref, b2_ref,
                    w3_ref, b3_ref, w4_ref, b4_ref, out_ref):
    # Fused 4-layer MLP for one batch tile.
    # bf16 MXU inputs, f32 accumulation; bias-add / ReLU in f32 on the VPU,
    # re-cast to bf16 only as the next matmul input.
    x = x_ref[...]                                                      # bf16 (tb, F)
    h = jnp.dot(x, w1_ref[...], preferred_element_type=jnp.float32) + b1_ref[...]
    h = jnp.maximum(h, 0.0).astype(jnp.bfloat16)                        # (tb, 128)
    h = jnp.dot(h, w2_ref[...], preferred_element_type=jnp.float32) + b2_ref[...]
    h = jnp.maximum(h, 0.0).astype(jnp.bfloat16)                        # (tb, 128)
    h = jnp.dot(h, w3_ref[...], preferred_element_type=jnp.float32) + b3_ref[...]
    h = jnp.maximum(h, 0.0).astype(jnp.bfloat16)                        # (tb, 128)
    out = jnp.dot(h, w4_ref[...], preferred_element_type=jnp.float32) + b4_ref[...]
    out_ref[...] = out.astype(out_ref.dtype)                            # (tb, out_dim)


def qnetwork_forward(x, params, tb=4096):
    """x: [B, input_shape] f32; params: dict of (w, b) per layer, w is [in, out]."""
    B, F = x.shape
    out_dim = params["w4"].shape[1]
    if B == 0:
        return jnp.zeros((0, out_dim), jnp.float32)

    # ---- lane-dense padding of the *hidden* widths only (zero-pad -> exact math)
    H1 = _round_up(params["w1"].shape[1], LANE)   # 64  -> 128
    H2 = _round_up(params["w2"].shape[1], LANE)   # 128 -> 128
    H3 = _round_up(params["w3"].shape[1], LANE)   # 64  -> 128

    # Weights in bf16 (MXU native rate, half the DMA); biases stay f32 since
    # they are added to the f32 accumulator on the VPU.
    w1 = _pad2d(params["w1"], F, H1).astype(jnp.bfloat16)
    b1 = _pad2d(params["b1"], 1, H1)
    w2 = _pad2d(params["w2"], H1, H2).astype(jnp.bfloat16)
    b2 = _pad2d(params["b2"], 1, H2)
    w3 = _pad2d(params["w3"], H2, H3).astype(jnp.bfloat16)
    b3 = _pad2d(params["b3"], 1, H3)
    w4 = _pad2d(params["w4"], H3, out_dim).astype(jnp.bfloat16)   # output lanes NOT padded
    b4 = params["b4"]                                             # (1, out_dim) f32

    # ---- balanced batch tiling --------------------------------------------
    num_tiles = max(1, _cdiv(B, tb))
    if num_tiles == 1 and B > BATCH_ALIGN:
        num_tiles = 2            # give v7x's second TensorCore a tile to chew on
    tb_eff = _round_up(_cdiv(B, num_tiles), BATCH_ALIGN)
    B_pad = tb_eff * num_tiles
    x_p = jnp.pad(x, ((0, B_pad - B), (0, 0))).astype(jnp.bfloat16)
    grid = (num_tiles,)

    def resident(arr):
        # Same block index every grid step -> parameter stays VMEM-resident.
        return pl.BlockSpec(arr.shape, lambda i: (0, 0))

    out_p = pl.pallas_call(
        qnetwork_kernel,
        out_shape=jax.ShapeDtypeStruct((B_pad, out_dim), jnp.float32),
        grid=grid,
        in_specs=[
            pl.BlockSpec((tb_eff, F), lambda i: (i, 0)),      # x: batch-tiled
            resident(w1), resident(b1),
            resident(w2), resident(b2),
            resident(w3), resident(b3),
            resident(w4), resident(b4),
        ],
        out_specs=pl.BlockSpec((tb_eff, out_dim), lambda i: (i, 0)),
        compiler_params=pltpu.CompilerParams(
            dimension_semantics=("parallel",),        # megacore sharding on v7x
            vmem_limit_bytes=48 * 1024 * 1024,        # safe on v7x's 64 MiB; raise on v5e/v6e
        ),
    )(x_p, w1, b1, w2, b2, w3, b3, w4, b4)

    # Strip only the batch padding (output lanes are already exact width).
    return out_p[:B]


def init_params(key, input_shape, output_shape):
    """Deterministic init mimicking nn.Linear's uniform(-1/sqrt(fan_in), +1/sqrt(fan_in)).
    Weights returned already transposed to [in, out]; biases as [1, out]."""
    dims = [(input_shape, 64), (64, 128), (128, 64), (64, output_shape)]
    params = {}
    for idx, (fan_in, fan_out) in enumerate(dims, start=1):
        key, kw, kb = jax.random.split(key, 3)
        bound = 1.0 / jnp.sqrt(jnp.float32(fan_in))
        params[f"w{idx}"] = jax.random.uniform(
            kw, (fan_in, fan_out), jnp.float32, minval=-bound, maxval=bound)
        params[f"b{idx}"] = jax.random.uniform(
            kb, (1, fan_out), jnp.float32, minval=-bound, maxval=bound)
    return params


def qnetwork_reference(x, params):
    """Pure-JAX f32 reference of the PyTorch forward pass."""
    h = jnp.maximum(x @ params["w1"] + params["b1"], 0.0)
    h = jnp.maximum(h @ params["w2"] + params["b2"], 0.0)
    h = jnp.maximum(h @ params["w3"] + params["b3"], 0.0)
    return h @ params["w4"] + params["b4"]


if __name__ == "__main__":
    key = jax.random.PRNGKey(0)

    input_shape = 8     # state dimension
    output_shape = 4    # number of actions
    batch = 2

    key, kx = jax.random.split(key)
    x = jax.random.normal(kx, (batch, input_shape), jnp.float32)
    params = init_params(key, input_shape, output_shape)

    # bf16 matmul inputs (f32 accumulate) -> compare against the f32 reference
    # with a loosened tolerance.
    TOL = 3e-2

    # 1) Small batch: single tile.
    out = jax.block_until_ready(qnetwork_forward(x, params))
    ref = qnetwork_reference(x, params)
    assert out.shape == (batch, output_shape)
    assert jnp.allclose(out, ref, atol=TOL, rtol=TOL)

    # 2) Ragged batch, default tile: balanced split into >=2 tiles (megacore path).
    key, kx2 = jax.random.split(key)
    x_big = jax.random.normal(kx2, (300, input_shape), jnp.float32)
    out_big = jax.block_until_ready(qnetwork_forward(x_big, params))
    ref_big = qnetwork_reference(x_big, params)
    assert out_big.shape == (300, output_shape)
    assert jnp.allclose(out_big, ref_big, atol=TOL, rtol=TOL)

    # 3) Ragged batch, small explicit tile: exercises a longer grid.
    out_multi = jax.block_until_ready(qnetwork_forward(x_big, params, tb=96))
    assert out_multi.shape == (300, output_shape)
    assert jnp.allclose(out_multi, ref_big, atol=TOL, rtol=TOL)

    print("KERNEL_OK")
</pallas_src>

<mosaic_0001>
module attributes {stable_mosaic.version = 11 : i64} {
  func.func @qnetwork_kernel(%arg0: i32, %arg1: memref<16x8xbf16, #tpu.memory_space<vmem>>, %arg2: memref<8x128xbf16, #tpu.memory_space<vmem>>, %arg3: memref<1x128xf32, #tpu.memory_space<vmem>>, %arg4: memref<128x128xbf16, #tpu.memory_space<vmem>>, %arg5: memref<1x128xf32, #tpu.memory_space<vmem>>, %arg6: memref<128x128xbf16, #tpu.memory_space<vmem>>, %arg7: memref<1x128xf32, #tpu.memory_space<vmem>>, %arg8: memref<128x4xbf16, #tpu.memory_space<vmem>>, %arg9: memref<1x4xf32, #tpu.memory_space<vmem>>, %arg10: memref<16x4xf32, #tpu.memory_space<vmem>>) attributes {dimension_semantics = [#tpu.dimension_semantics<parallel>], iteration_bounds = array<i64: 1>, scalar_prefetch = 0 : i64, scratch_operands = 0 : i64, tpu.core_type = #tpu.core_type<tc>, window_params = [{transform_indices = @transform_0, window_bounds = array<i64: 16, 8>}, {pipeline_mode = #tpu.pipeline_mode<synchronous>, transform_indices = @transform_1, window_bounds = array<i64: 8, 128>}, {pipeline_mode = #tpu.pipeline_mode<synchronous>, transform_indices = @transform_2, window_bounds = array<i64: 1, 128>}, {pipeline_mode = #tpu.pipeline_mode<synchronous>, transform_indices = @transform_3, window_bounds = array<i64: 128, 128>}, {pipeline_mode = #tpu.pipeline_mode<synchronous>, transform_indices = @transform_4, window_bounds = array<i64: 1, 128>}, {pipeline_mode = #tpu.pipeline_mode<synchronous>, transform_indices = @transform_5, window_bounds = array<i64: 128, 128>}, {pipeline_mode = #tpu.pipeline_mode<synchronous>, transform_indices = @transform_6, window_bounds = array<i64: 1, 128>}, {pipeline_mode = #tpu.pipeline_mode<synchronous>, transform_indices = @transform_7, window_bounds = array<i64: 128, 4>}, {pipeline_mode = #tpu.pipeline_mode<synchronous>, transform_indices = @transform_8, window_bounds = array<i64: 1, 4>}, {transform_indices = @transform_9, window_bounds = array<i64: 16, 4>}]} {
    %c0 = arith.constant 0 : index
    %c0_0 = arith.constant 0 : index
    %0 = vector.load %arg1[%c0, %c0_0] : memref<16x8xbf16, #tpu.memory_space<vmem>>, vector<16x8xbf16>
    %c0_1 = arith.constant 0 : index
    %c0_2 = arith.constant 0 : index
    %1 = vector.load %arg2[%c0_1, %c0_2] : memref<8x128xbf16, #tpu.memory_space<vmem>>, vector<8x128xbf16>
    %cst = arith.constant dense<0.000000e+00> : vector<16x128xf32>
    %2 = tpu.matmul %0, %1, %cst {dimension_numbers = #tpu.dot_dimension_numbers<[1], [0], [0], [1], [0, 0, 1, 1], [], []>} : vector<16x8xbf16>, vector<8x128xbf16>, vector<16x128xf32> -> vector<16x128xf32>
    %c0_3 = arith.constant 0 : index
    %c0_4 = arith.constant 0 : index
    %3 = vector.load %arg3[%c0_3, %c0_4] : memref<1x128xf32, #tpu.memory_space<vmem>>, vector<1x128xf32>
    %4 = vector.broadcast %3 : vector<1x128xf32> to vector<16x128xf32>
    %5 = arith.addf %2, %4 : vector<16x128xf32>
    %cst_5 = arith.constant 0.000000e+00 : f32
    %6 = vector.broadcast %cst_5 : f32 to vector<16x128xf32>
    %7 = arith.maximumf %5, %6 : vector<16x128xf32>
    %8 = arith.truncf %7 : vector<16x128xf32> to vector<16x128xbf16>
    %c0_6 = arith.constant 0 : index
    %c0_7 = arith.constant 0 : index
    %9 = vector.load %arg4[%c0_6, %c0_7] : memref<128x128xbf16, #tpu.memory_space<vmem>>, vector<128x128xbf16>
    %cst_8 = arith.constant dense<0.000000e+00> : vector<16x128xf32>
    %10 = tpu.matmul %8, %9, %cst_8 {dimension_numbers = #tpu.dot_dimension_numbers<[1], [0], [0], [1], [0, 0, 1, 1], [], []>} : vector<16x128xbf16>, vector<128x128xbf16>, vector<16x128xf32> -> vector<16x128xf32>
    %c0_9 = arith.constant 0 : index
    %c0_10 = arith.constant 0 : index
    %11 = vector.load %arg5[%c0_9, %c0_10] : memref<1x128xf32, #tpu.memory_space<vmem>>, vector<1x128xf32>
    %12 = vector.broadcast %11 : vector<1x128xf32> to vector<16x128xf32>
    %13 = arith.addf %10, %12 : vector<16x128xf32>
    %cst_11 = arith.constant 0.000000e+00 : f32
    %14 = vector.broadcast %cst_11 : f32 to vector<16x128xf32>
    %15 = arith.maximumf %13, %14 : vector<16x128xf32>
    %16 = arith.truncf %15 : vector<16x128xf32> to vector<16x128xbf16>
    %c0_12 = arith.constant 0 : index
    %c0_13 = arith.constant 0 : index
    %17 = vector.load %arg6[%c0_12, %c0_13] : memref<128x128xbf16, #tpu.memory_space<vmem>>, vector<128x128xbf16>
    %cst_14 = arith.constant dense<0.000000e+00> : vector<16x128xf32>
    %18 = tpu.matmul %16, %17, %cst_14 {dimension_numbers = #tpu.dot_dimension_numbers<[1], [0], [0], [1], [0, 0, 1, 1], [], []>} : vector<16x128xbf16>, vector<128x128xbf16>, vector<16x128xf32> -> vector<16x128xf32>
    %c0_15 = arith.constant 0 : index
    %c0_16 = arith.constant 0 : index
    %19 = vector.load %arg7[%c0_15, %c0_16] : memref<1x128xf32, #tpu.memory_space<vmem>>, vector<1x128xf32>
    %20 = vector.broadcast %19 : vector<1x128xf32> to vector<16x128xf32>
    %21 = arith.addf %18, %20 : vector<16x128xf32>
    %cst_17 = arith.constant 0.000000e+00 : f32
    %22 = vector.broadcast %cst_17 : f32 to vector<16x128xf32>
    %23 = arith.maximumf %21, %22 : vector<16x128xf32>
    %24 = arith.truncf %23 : vector<16x128xf32> to vector<16x128xbf16>
    %c0_18 = arith.constant 0 : index
    %c0_19 = arith.constant 0 : index
    %25 = vector.load %arg8[%c0_18, %c0_19] : memref<128x4xbf16, #tpu.memory_space<vmem>>, vector<128x4xbf16>
    %cst_20 = arith.constant dense<0.000000e+00> : vector<16x4xf32>
    %26 = tpu.matmul %24, %25, %cst_20 {dimension_numbers = #tpu.dot_dimension_numbers<[1], [0], [0], [1], [0, 0, 1, 1], [], []>} : vector<16x128xbf16>, vector<128x4xbf16>, vector<16x4xf32> -> vector<16x4xf32>
    %c0_21 = arith.constant 0 : index
    %c0_22 = arith.constant 0 : index
    %27 = vector.load %arg9[%c0_21, %c0_22] : memref<1x4xf32, #tpu.memory_space<vmem>>, vector<1x4xf32>
    %28 = vector.broadcast %27 : vector<1x4xf32> to vector<16x4xf32>
    %29 = arith.addf %26, %28 : vector<16x4xf32>
    %c0_23 = arith.constant 0 : index
    %c0_24 = arith.constant 0 : index
    %30 = vector.load %arg10[%c0_23, %c0_24] : memref<16x4xf32, #tpu.memory_space<vmem>>, vector<16x4xf32>
    tpu.vector_store %arg10[%c0_23, %c0_24], %29 {strides = array<i32>} : memref<16x4xf32, #tpu.memory_space<vmem>>, vector<16x4xf32>,
    return
  }
  func.func @transform_0(%arg0: i32) -> (i32, i32) {
    %c0_i32 = arith.constant 0 : i32
    %c0_i32_0 = arith.constant 0 : i32
    return %arg0, %c0_i32 : i32, i32
  }
  func.func @transform_1(%arg0: i32) -> (i32, i32) {
    %c0_i32 = arith.constant 0 : i32
    %c0_i32_0 = arith.constant 0 : i32
    %c0_i32_1 = arith.constant 0 : i32
    return %c0_i32, %c0_i32_0 : i32, i32
  }
  func.func @transform_2(%arg0: i32) -> (i32, i32) {
    %c0_i32 = arith.constant 0 : i32
    %c0_i32_0 = arith.constant 0 : i32
    %c0_i32_1 = arith.constant 0 : i32
    return %c0_i32, %c0_i32_0 : i32, i32
  }
  func.func @transform_3(%arg0: i32) -> (i32, i32) {
    %c0_i32 = arith.constant 0 : i32
    %c0_i32_0 = arith.constant 0 : i32
    %c0_i32_1 = arith.constant 0 : i32
    return %c0_i32, %c0_i32_0 : i32, i32
  }
  func.func @transform_4(%arg0: i32) -> (i32, i32) {
    %c0_i32 = arith.constant 0 : i32
    %c0_i32_0 = arith.constant 0 : i32
    %c0_i32_1 = arith.constant 0 : i32
    return %c0_i32, %c0_i32_0 : i32, i32
  }
  func.func @transform_5(%arg0: i32) -> (i32, i32) {
    %c0_i32 = arith.constant 0 : i32
    %c0_i32_0 = arith.constant 0 : i32
    %c0_i32_1 = arith.constant 0 : i32
    return %c0_i32, %c0_i32_0 : i32, i32
  }
  func.func @transform_6(%arg0: i32) -> (i32, i32) {
    %c0_i32 = arith.constant 0 : i32
    %c0_i32_0 = arith.constant 0 : i32
    %c0_i32_1 = arith.constant 0 : i32
    return %c0_i32, %c0_i32_0 : i32, i32
  }
  func.func @transform_7(%arg0: i32) -> (i32, i32) {
    %c0_i32 = arith.constant 0 : i32
    %c0_i32_0 = arith.constant 0 : i32
    %c0_i32_1 = arith.constant 0 : i32
    return %c0_i32, %c0_i32_0 : i32, i32
  }
  func.func @transform_8(%arg0: i32) -> (i32, i32) {
    %c0_i32 = arith.constant 0 : i32
    %c0_i32_0 = arith.constant 0 : i32
    %c0_i32_1 = arith.constant 0 : i32
    return %c0_i32, %c0_i32_0 : i32, i32
  }
  func.func @transform_9(%arg0: i32) -> (i32, i32) {
    %c0_i32 = arith.constant 0 : i32
    %c0_i32_0 = arith.constant 0 : i32
    return %arg0, %c0_i32 : i32, i32
  }
}

</mosaic_0001>

<llo_original>
// kernel: tpu_custom_call.1
$region0: #{tpu_custom_call.1}
  #allocation0 [shape = 'u32[]', space=smem, size = 0x4, offset = 0x4, fixed_abs, tag = 'smem constant byte address 0x4 - core index']
  #allocation1 [shape = 'u32[144,128]{1,0:T(1,128)}', space=vmem, size = 0x12000, scoped, tag = 'internal scratch']
  %s0 = inlined_call_operand.vmem [shape: bf16[16,8], index: 0, kind: input, shape index: {}]
  %s1 = inlined_call_operand.vmem [shape: bf16[8,128], index: 1, kind: input, shape index: {}]
  %s2 = inlined_call_operand.vmem [shape: f32[1,128], index: 2, kind: input, shape index: {}]
  %s3 = inlined_call_operand.vmem [shape: bf16[128,128], index: 3, kind: input, shape index: {}]
  %s4 = inlined_call_operand.vmem [shape: f32[1,128], index: 4, kind: input, shape index: {}]
  %s5 = inlined_call_operand.hbm [shape: bf16[128,128], index: 5, kind: input, shape index: {}]
  %s6 = inlined_call_operand.vmem [shape: f32[1,128], index: 6, kind: input, shape index: {}]
  %s7 = inlined_call_operand.vmem [shape: bf16[128,4], index: 7, kind: input, shape index: {}]
  %s8 = inlined_call_operand.vmem [shape: f32[1,4], index: 8, kind: input, shape index: {}]
  %s9 = inlined_call_operand.vmem [shape: f32[16,4], index: 9, kind: output, shape index: {}]
  %s10 = sld [smem:[#allocation0]]
  $region50: #{tpu_custom_call.1} parent=0
    _
  %s12 = ssub.s32 1, %s10
  %s13 = scalar_select 0, %s12, %s10
  $region1: #{tpu_custom_call.1} parent=0
    #allocation2 [shape = 'u8[32768]{0}', space=vmem, size = 0x8000, scoped, tag = 'input window, operand 5, single buffered']
    #allocation3 [shape = 's32[1]{0}', space=sflag, size = 0x4, scoped, tag = 'scoped memory for tpu_custom_call.1']
    %14 = vsyncpa [#allocation3], 0
    // Predicated region
    $region2: #{tpu_custom_call.1} parent=1 // pred_check
      _
    $region3: #{tpu_custom_call.1} parent=1 // pred_check_branch
      %16 = sbr.rel (0) target = $region5
    $region4: #{tpu_custom_call.1} parent=1 // pred_region
      _
    $region5: #{tpu_custom_call.1} parent=1 // pred_fallthru
      _
    // Predicated region
    $region6: #{tpu_custom_call.1} parent=1 // pred_check
      _
    $region7: #{tpu_custom_call.1} parent=1 // pred_check_branch
      %18 = sbr.rel (0) target = $region9
    $region8: #{tpu_custom_call.1} parent=1 // pred_region
      _
    $region9: #{tpu_custom_call.1} parent=1 // pred_fallthru
      _
    // Predicated region
    $region10: #{tpu_custom_call.1} parent=1 // pred_check
      _
    $region11: #{tpu_custom_call.1} parent=1 // pred_check_branch
      %20 = sbr.rel (0) target = $region13
    $region12: #{tpu_custom_call.1} parent=1 // pred_region
      _
    $region13: #{tpu_custom_call.1} parent=1 // pred_fallthru
      _
    // Predicated region
    $region14: #{tpu_custom_call.1} parent=1 // pred_check
      _
    $region15: #{tpu_custom_call.1} parent=1 // pred_check_branch
      %22 = sbr.rel (0) target = $region17
    $region16: #{tpu_custom_call.1} parent=1 // pred_region
      _
    $region17: #{tpu_custom_call.1} parent=1 // pred_fallthru
      _
    // Predicated region
    $region18: #{tpu_custom_call.1} parent=1 // pred_check
      _
    $region19: #{tpu_custom_call.1} parent=1 // pred_check_branch
      %24 = sbr.rel (0) target = $region21
    $region20: #{tpu_custom_call.1} parent=1 // pred_region
      _
    $region21: #{tpu_custom_call.1} parent=1 // pred_fallthru
      _
    // Predicated region
    $region22: #{tpu_custom_call.1} parent=1 // pred_check
      _
    $region23: #{tpu_custom_call.1} parent=1 // pred_check_branch
      %26 = sbr.rel (0) target = $region25
    $region24: #{tpu_custom_call.1} parent=1 // pred_region
      %s28 = ssub.s32 1024, 1024
      %29 = vsyncadd [#allocation3], %s28
      %s30 = sshll.u32 [#allocation2], 4
      %s31 = int_to_ptr.vmem [resolvable:$true] %s30
      %36 = dma.hbm_to_vmem [thread:$0]  %s5, 1024, %s31, [#allocation3], 64, 64, 4
    $region25: #{tpu_custom_call.1} parent=1 // pred_fallthru
      _
    // Predicated region
    $region26: #{tpu_custom_call.1} parent=1 // pred_check
      _
    $region27: #{tpu_custom_call.1} parent=1 // pred_check_branch
      %38 = sbr.rel (0) target = $region29
    $region28: #{tpu_custom_call.1} parent=1 // pred_region
      _
    $region29: #{tpu_custom_call.1} parent=1 // pred_fallthru
      _
    // Predicated region
    $region30: #{tpu_custom_call.1} parent=1 // pred_check
      _
    $region31: #{tpu_custom_call.1} parent=1 // pred_check_branch
      %40 = sbr.rel (0) target = $region33
    $region32: #{tpu_custom_call.1} parent=1 // pred_region
      _
    $region33: #{tpu_custom_call.1} parent=1 // pred_fallthru
      _
    // Predicated region
    $region34: #{tpu_custom_call.1} parent=1 // pred_check
      _
    $region35: #{tpu_custom_call.1} parent=1 // pred_check_branch
      %42 = sbr.rel (0) target = $region37
    $region36: #{tpu_custom_call.1} parent=1 // pred_region
      _
    $region37: #{tpu_custom_call.1} parent=1 // pred_fallthru
      _
    // Predicated region
    $region38: #{tpu_custom_call.1} parent=1 // pred_check
      _
    $region39: #{tpu_custom_call.1} parent=1 // pred_check_branch
      %44 = sbr.rel (0) target = $region41
    $region40: #{tpu_custom_call.1} parent=1 // pred_region
      %45 = dma.done [#allocation3], 1024
    $region41: #{tpu_custom_call.1} parent=1 // pred_fallthru
      _
    %v47 = vld [vmem:[%s0] sm:$0xf]
    %v48 = vld [vmem:[%s0 + $0x4] sm:$0xf]
    %v49 = vld [vmem:[%s1] sm:$0xf]
    %v50 = vld [vmem:[%s2] sm:$0x1]
    %v52 = vlaneseq
    %v53 = vshrl.u32 %v52, 7
    %v54 = vsub.s32 0, %v53
    %v55 = vrot.slane %v50, %v54
    %v59 = vunpack.c.l.b16 %v47
    %v60 = vunpack.c.l.b16 %v48
    %v61 = vpack.c.b16 %v60, %v59
    %vm62 = vcmask 64512
    %v64 = vsel %vm62, %v61, 0
    %vm66 = vcmask 1043456
    %v68 = vsel %vm66, %v49, 0
    %70 = vmatprep.subr.bf16.mxu0 0
    %71 = vmatpush1.bf16.msra.mxu0 %v68
    %72 = vmatprep.subr.bf16.mxu0 0
    %73 = vmatpush1.bf16.msra.mxu0 0
    %74 = vmatprep.subr.bf16.mxu0 0
    %75 = vmatpush1.bf16.msra.mxu0 0
    %76 = vmatprep.subr.bf16.mxu0 0
    %77 = vmatpush1.bf16.msra.mxu0 0
    %78 = vmatprep.subr.bf16.mxu0 0
    %79 = vmatpush1.bf16.msra.mxu0 0
    %80 = vmatprep.subr.bf16.mxu0 0
    %81 = vmatpush1.bf16.msra.mxu0 0
    %82 = vmatprep.subr.bf16.mxu0 0
    %83 = vmatpush1.bf16.msra.mxu0 0
    %84 = vmatprep.subr.bf16.mxu0 0
    %85 = vmatpush1.bf16.msra.mxu0 0
    %86 = vmatprep.subr.bf16.mxu0 0
    %87 = vmatpush1.bf16.msra.mxu0 0
    %88 = vmatprep.subr.bf16.mxu0 0
    %89 = vmatpush1.bf16.msra.mxu0 0
    %90 = vmatprep.subr.bf16.mxu0 0
    %91 = vmatpush1.bf16.msra.mxu0 0
    %92 = vmatprep.subr.bf16.mxu0 0
    %93 = vmatpush1.bf16.msra.mxu0 0
    %94 = vmatprep.subr.bf16.mxu0 0
    %95 = vmatpush1.bf16.msra.mxu0 0
    %96 = vmatprep.subr.bf16.mxu0 0
    %97 = vmatpush1.bf16.msra.mxu0 0
    %98 = vmatprep.subr.bf16.mxu0 0
    %99 = vmatpush1.bf16.msra.mxu0 0
    %100 = vmatprep.subr.bf16.mxu0 0
    %101 = vmatpush1.bf16.msra.mxu0 0
    %102 = vmatprep.mubr.bf16.mxu0 0
    %103 = vmatmul.mubr.bf16.gmra.mrb[0].mxu0 %v64
    %v104 = vpop.f32.mrb[0].mxu0
    %v105 = vadd.f32 %v55, %v104
    %v106 = vpop.f32.mrb[0].mxu0
    %v107 = vpop.f32.mrb[0].mxu0
    %v108 = vadd.f32 %v55, %v107
    %v109 = vpop.f32.mrb[0].mxu0
    %110 = vdwg.mxu0
    %v111 = vmax.f32 %v105, 0.0
    %v112 = vmax.f32 %v108, 0.0
    %v113 = vpack.c.bf16 %v112, %v111
    %v114 = vld [vmem:[%s3] sm:$0xf]
    %v115 = vld [vmem:[%s3 + $0x4] sm:$0xf]
    %v116 = vld [vmem:[%s3 + $0x8] sm:$0xf]
    %v117 = vld [vmem:[%s3 + $0xc] sm:$0xf]
    %v118 = vld [vmem:[%s3 + $0x10] sm:$0xf]
    %v119 = vld [vmem:[%s3 + $0x14] sm:$0xf]
    %v120 = vld [vmem:[%s3 + $0x18] sm:$0xf]
    %v121 = vld [vmem:[%s3 + $0x1c] sm:$0xf]
    %v122 = vld [vmem:[%s3 + $0x20] sm:$0xf]
    %v123 = vld [vmem:[%s3 + $0x24] sm:$0xf]
    %v124 = vld [vmem:[%s3 + $0x28] sm:$0xf]
    %v125 = vld [vmem:[%s3 + $0x2c] sm:$0xf]
    %v126 = vld [vmem:[%s3 + $0x30] sm:$0xf]
    %v127 = vld [vmem:[%s3 + $0x34] sm:$0xf]
    %v128 = vld [vmem:[%s3 + $0x38] sm:$0xf]
    %v129 = vld [vmem:[%s3 + $0x3c] sm:$0xf]
    %v130 = vld [vmem:[%s4] sm:$0x1]
    %v132 = vlaneseq
    %v133 = vshrl.u32 %v132, 7
    %v134 = vsub.s32 0, %v133
    %v135 = vrot.slane %v130, %v134
    %v153 = vunpack.c.l.b16 %v114
    %v154 = vunpack.c.l.b16 %v115
    %v155 = vunpack.c.l.b16 %v116
    %v156 = vunpack.c.l.b16 %v117
    %v157 = vunpack.c.l.b16 %v118
    %v158 = vunpack.c.l.b16 %v119
    %v159 = vunpack.c.l.b16 %v120
    %v160 = vunpack.c.l.b16 %v121
    %v161 = vunpack.c.l.b16 %v122
    %v162 = vunpack.c.l.b16 %v123
    %v163 = vunpack.c.l.b16 %v124
    %v164 = vunpack.c.l.b16 %v125
    %v165 = vunpack.c.l.b16 %v126
    %v166 = vunpack.c.l.b16 %v127
    %v167 = vunpack.c.l.b16 %v128
    %v168 = vunpack.c.l.b16 %v129
    %v169 = vpack.c.b16 %v154, %v153
    %v170 = vpack.c.b16 %v156, %v155
    %v171 = vpack.c.b16 %v158, %v157
    %v172 = vpack.c.b16 %v160, %v159
    %v173 = vpack.c.b16 %v162, %v161
    %v174 = vpack.c.b16 %v164, %v163
    %v175 = vpack.c.b16 %v166, %v165
    %v176 = vpack.c.b16 %v168, %v167
    %185 = vmatprep.subr.bf16.mxu0 0
    %186 = vmatpush1.bf16.msra.mxu0 %v169
    %187 = vmatprep.subr.bf16.mxu0 0
    %188 = vmatpush1.bf16.msra.mxu0 %v170
    %189 = vmatprep.subr.bf16.mxu0 0
    %190 = vmatpush1.bf16.msra.mxu0 %v171
    %191 = vmatprep.subr.bf16.mxu0 0
    %192 = vmatpush1.bf16.msra.mxu0 %v172
    %193 = vmatprep.subr.bf16.mxu0 0
    %194 = vmatpush1.bf16.msra.mxu0 %v173
    %195 = vmatprep.subr.bf16.mxu0 0
    %196 = vmatpush1.bf16.msra.mxu0 %v174
    %197 = vmatprep.subr.bf16.mxu0 0
    %198 = vmatpush1.bf16.msra.mxu0 %v175
    %199 = vmatprep.subr.bf16.mxu0 0
    %200 = vmatpush1.bf16.msra.mxu0 %v176
    %201 = vmatprep.subr.bf16.mxu0 0
    %202 = vmatpush1.bf16.msra.mxu0 0
    %203 = vmatprep.subr.bf16.mxu0 0
    %204 = vmatpush1.bf16.msra.mxu0 0
    %205 = vmatprep.subr.bf16.mxu0 0
    %206 = vmatpush1.bf16.msra.mxu0 0
    %207 = vmatprep.subr.bf16.mxu0 0
    %208 = vmatpush1.bf16.msra.mxu0 0
    %209 = vmatprep.subr.bf16.mxu0 0
    %210 = vmatpush1.bf16.msra.mxu0 0
    %211 = vmatprep.subr.bf16.mxu0 0
    %212 = vmatpush1.bf16.msra.mxu0 0
    %213 = vmatprep.subr.bf16.mxu0 0
    %214 = vmatpush1.bf16.msra.mxu0 0
    %215 = vmatprep.subr.bf16.mxu0 0
    %216 = vmatpush1.bf16.msra.mxu0 0
    %217 = vmatprep.mubr.bf16.mxu0 0
    %218 = vmatmul.mubr.bf16.gmra.mrb[0].mxu0 %v113
    %v219 = vpop.f32.mrb[0].mxu0
    %v220 = vadd.f32 %v135, %v219
    %v221 = vpop.f32.mrb[0].mxu0
    %v222 = vpop.f32.mrb[0].mxu0
    %v223 = vadd.f32 %v135, %v222
    %v224 = vpop.f32.mrb[0].mxu0
    %225 = vdwg.mxu0
    %v226 = vmax.f32 %v220, 0.0
    %v227 = vmax.f32 %v223, 0.0
    %v228 = vpack.c.bf16 %v227, %v226
    %v229 = vld [vmem:[#allocation2] sm:$0xf]
    %v230 = vld [vmem:[#allocation2 + $0x4] sm:$0xf]
    %v231 = vld [vmem:[#allocation2 + $0x8] sm:$0xf]
    %v232 = vld [vmem:[#allocation2 + $0xc] sm:$0xf]
    %v233 = vld [vmem:[#allocation2 + $0x10] sm:$0xf]
    %v234 = vld [vmem:[#allocation2 + $0x14] sm:$0xf]
    %v235 = vld [vmem:[#allocation2 + $0x18] sm:$0xf]
    %v236 = vld [vmem:[#allocation2 + $0x1c] sm:$0xf]
    %v237 = vld [vmem:[#allocation2 + $0x20] sm:$0xf]
    %v238 = vld [vmem:[#allocation2 + $0x24] sm:$0xf]
    %v239 = vld [vmem:[#allocation2 + $0x28] sm:$0xf]
    %v240 = vld [vmem:[#allocation2 + $0x2c] sm:$0xf]
    %v241 = vld [vmem:[#allocation2 + $0x30] sm:$0xf]
    %v242 = vld [vmem:[#allocation2 + $0x34] sm:$0xf]
    %v243 = vld [vmem:[#allocation2 + $0x38] sm:$0xf]
    %v244 = vld [vmem:[#allocation2 + $0x3c] sm:$0xf]
    %v245 = vld [vmem:[%s6] sm:$0x1]
    %v247 = vlaneseq
    %v248 = vshrl.u32 %v247, 7
    %v249 = vsub.s32 0, %v248
    %v250 = vrot.slane %v245, %v249
    %v268 = vunpack.c.l.b16 %v229
    %v269 = vunpack.c.l.b16 %v230
    %v270 = vunpack.c.l.b16 %v231
    %v271 = vunpack.c.l.b16 %v232
    %v272 = vunpack.c.l.b16 %v233
    %v273 = vunpack.c.l.b16 %v234
    %v274 = vunpack.c.l.b16 %v235
    %v275 = vunpack.c.l.b16 %v236
    %v276 = vunpack.c.l.b16 %v237
    %v277 = vunpack.c.l.b16 %v238
    %v278 = vunpack.c.l.b16 %v239
    %v279 = vunpack.c.l.b16 %v240
    %v280 = vunpack.c.l.b16 %v241
    %v281 = vunpack.c.l.b16 %v242
    %v282 = vunpack.c.l.b16 %v243
    %v283 = vunpack.c.l.b16 %v244
    %v284 = vpack.c.b16 %v269, %v268
    %v285 = vpack.c.b16 %v271, %v270
    %v286 = vpack.c.b16 %v273, %v272
    %v287 = vpack.c.b16 %v275, %v274
    %v288 = vpack.c.b16 %v277, %v276
    %v289 = vpack.c.b16 %v279, %v278
    %v290 = vpack.c.b16 %v281, %v280
    %v291 = vpack.c.b16 %v283, %v282
    %300 = vmatprep.subr.bf16.mxu0 0
    %301 = vmatpush1.bf16.msra.mxu0 %v284
    %302 = vmatprep.subr.bf16.mxu0 0
    %303 = vmatpush1.bf16.msra.mxu0 %v285
    %304 = vmatprep.subr.bf16.mxu0 0
    %305 = vmatpush1.bf16.msra.mxu0 %v286
    %306 = vmatprep.subr.bf16.mxu0 0
    %307 = vmatpush1.bf16.msra.mxu0 %v287
    %308 = vmatprep.subr.bf16.mxu0 0
    %309 = vmatpush1.bf16.msra.mxu0 %v288
    %310 = vmatprep.subr.bf16.mxu0 0
    %311 = vmatpush1.bf16.msra.mxu0 %v289
    %312 = vmatprep.subr.bf16.mxu0 0
    %313 = vmatpush1.bf16.msra.mxu0 %v290
    %314 = vmatprep.subr.bf16.mxu0 0
    %315 = vmatpush1.bf16.msra.mxu0 %v291
    %316 = vmatprep.subr.bf16.mxu0 0
    %317 = vmatpush1.bf16.msra.mxu0 0
    %318 = vmatprep.subr.bf16.mxu0 0
    %319 = vmatpush1.bf16.msra.mxu0 0
    %320 = vmatprep.subr.bf16.mxu0 0
    %321 = vmatpush1.bf16.msra.mxu0 0
    %322 = vmatprep.subr.bf16.mxu0 0
    %323 = vmatpush1.bf16.msra.mxu0 0
    %324 = vmatprep.subr.bf16.mxu0 0
    %325 = vmatpush1.bf16.msra.mxu0 0
    %326 = vmatprep.subr.bf16.mxu0 0
    %327 = vmatpush1.bf16.msra.mxu0 0
    %328 = vmatprep.subr.bf16.mxu0 0
    %329 = vmatpush1.bf16.msra.mxu0 0
    %330 = vmatprep.subr.bf16.mxu0 0
    %331 = vmatpush1.bf16.msra.mxu0 0
    %332 = vmatprep.mubr.bf16.mxu0 0
    %333 = vmatmul.mubr.bf16.gmra.mrb[0].mxu0 %v228
    %v334 = vpop.f32.mrb[0].mxu0
    %v335 = vadd.f32 %v250, %v334
    %v336 = vpop.f32.mrb[0].mxu0
    %v337 = vpop.f32.mrb[0].mxu0
    %v338 = vadd.f32 %v250, %v337
    %v339 = vpop.f32.mrb[0].mxu0
    %340 = vdwg.mxu0
    %v341 = vmax.f32 %v335, 0.0
    %v342 = vmax.f32 %v338, 0.0
    %v343 = vpack.c.bf16 %v342, %v341
    %v344 = vld [vmem:[%s7] sm:$0xf]
    %v345 = vld [vmem:[%s7 + $0x4] sm:$0xf]
    %v346 = vld [vmem:[%s7 + $0x8] sm:$0xf]
    %v347 = vld [vmem:[%s7 + $0xc] sm:$0xf]
    %v348 = vld [vmem:[%s7 + $0x10] sm:$0xf]
    %v349 = vld [vmem:[%s7 + $0x14] sm:$0xf]
    %v350 = vld [vmem:[%s7 + $0x18] sm:$0xf]
    %v351 = vld [vmem:[%s7 + $0x1c] sm:$0xf]
    %v352 = vld [vmem:[%s7 + $0x20] sm:$0xf]
    %v353 = vld [vmem:[%s7 + $0x24] sm:$0xf]
    %v354 = vld [vmem:[%s7 + $0x28] sm:$0xf]
    %v355 = vld [vmem:[%s7 + $0x2c] sm:$0xf]
    %v356 = vld [vmem:[%s7 + $0x30] sm:$0xf]
    %v357 = vld [vmem:[%s7 + $0x34] sm:$0xf]
    %v358 = vld [vmem:[%s7 + $0x38] sm:$0xf]
    %v359 = vld [vmem:[%s7 + $0x3c] sm:$0xf]
    %v360 = vld [vmem:[%s8] sm:$0x1]
    %v362 = vlaneseq
    %v363 = vshrl.u32 %v362, 7
    %v364 = vsub.s32 0, %v363
    %v365 = vrot.slane %v360, %v364
    %v383 = vunpack.c.l.b16 %v344
    %v384 = vunpack.c.l.b16 %v345
    %v385 = vunpack.c.l.b16 %v346
    %v386 = vunpack.c.l.b16 %v347
    %v387 = vunpack.c.l.b16 %v348
    %v388 = vunpack.c.l.b16 %v349
    %v389 = vunpack.c.l.b16 %v350
    %v390 = vunpack.c.l.b16 %v351
    %v391 = vunpack.c.l.b16 %v352
    %v392 = vunpack.c.l.b16 %v353
    %v393 = vunpack.c.l.b16 %v354
    %v394 = vunpack.c.l.b16 %v355
    %v395 = vunpack.c.l.b16 %v356
    %v396 = vunpack.c.l.b16 %v357
    %v397 = vunpack.c.l.b16 %v358
    %v398 = vunpack.c.l.b16 %v359
    %v399 = vpack.c.b16 %v384, %v383
    %v400 = vpack.c.b16 %v386, %v385
    %v401 = vpack.c.b16 %v388, %v387
    %v402 = vpack.c.b16 %v390, %v389
    %v403 = vpack.c.b16 %v392, %v391
    %v404 = vpack.c.b16 %v394, %v393
    %v405 = vpack.c.b16 %v396, %v395
    %v406 = vpack.c.b16 %v398, %v397
    %415 = vmatprep.subr.bf16.mxu0 0
    %416 = vmatpush1.bf16.msra.mxu0 %v399
    %417 = vmatprep.subr.bf16.mxu0 0
    %418 = vmatpush1.bf16.msra.mxu0 %v400
    %419 = vmatprep.subr.bf16.mxu0 0
    %420 = vmatpush1.bf16.msra.mxu0 %v401
    %421 = vmatprep.subr.bf16.mxu0 0
    %422 = vmatpush1.bf16.msra.mxu0 %v402
    %423 = vmatprep.subr.bf16.mxu0 0
    %424 = vmatpush1.bf16.msra.mxu0 %v403
    %425 = vmatprep.subr.bf16.mxu0 0
    %426 = vmatpush1.bf16.msra.mxu0 %v404
    %427 = vmatprep.subr.bf16.mxu0 0
    %428 = vmatpush1.bf16.msra.mxu0 %v405
    %429 = vmatprep.subr.bf16.mxu0 0
    %430 = vmatpush1.bf16.msra.mxu0 %v406
    %431 = vmatprep.subr.bf16.mxu0 0
    %432 = vmatpush1.bf16.msra.mxu0 0
    %433 = vmatprep.subr.bf16.mxu0 0
    %434 = vmatpush1.bf16.msra.mxu0 0
    %435 = vmatprep.subr.bf16.mxu0 0
    %436 = vmatpush1.bf16.msra.mxu0 0
    %437 = vmatprep.subr.bf16.mxu0 0
    %438 = vmatpush1.bf16.msra.mxu0 0
    %439 = vmatprep.subr.bf16.mxu0 0
    %440 = vmatpush1.bf16.msra.mxu0 0
    %441 = vmatprep.subr.bf16.mxu0 0
    %442 = vmatpush1.bf16.msra.mxu0 0
    %443 = vmatprep.subr.bf16.mxu0 0
    %444 = vmatpush1.bf16.msra.mxu0 0
    %445 = vmatprep.subr.bf16.mxu0 0
    %446 = vmatpush1.bf16.msra.mxu0 0
    %447 = vmatprep.mubr.bf16.mxu0 0
    %448 = vmatmul.mubr.bf16.gmra.mrb[0].mxu0 %v343
    %v449 = vpop.f32.mrb[0].mxu0
    %v450 = vadd.f32 %v365, %v449
    %v451 = vpop.f32.mrb[0].mxu0
    %v452 = vpop.f32.mrb[0].mxu0
    %v453 = vadd.f32 %v365, %v452
    %v454 = vpop.f32.mrb[0].mxu0
    %455 = vdwg.mxu0
    %vm456 = vcmask 31744
    %457 = vst.msk [vmem:[%s9] sm:$0xff] %vm456, %v450
    %458 = vst.msk [vmem:[%s9 + $0x8] sm:$0xff] %vm456, %v453
    // Predicated region
    $region42: #{tpu_custom_call.1} parent=1 // pred_check
      _
    $region43: #{tpu_custom_call.1} parent=1 // pred_check_branch
      %460 = sbr.rel (0) target = $region45
    $region44: #{tpu_custom_call.1} parent=1 // pred_region
      _
    $region45: #{tpu_custom_call.1} parent=1 // pred_fallthru
      _
    // Predicated region
    $region46: #{tpu_custom_call.1} parent=1 // pred_check
      _
    $region47: #{tpu_custom_call.1} parent=1 // pred_check_branch
      %462 = sbr.rel (0) target = $region49
    $region48: #{tpu_custom_call.1} parent=1 // pred_region
      _
    $region49: #{tpu_custom_call.1} parent=1 // pred_fallthru
      _
    %463 = vsyncpa [#allocation3], 1

</llo_original>
